<compile_context>
chip_gen: v7x
topology: tpu7x:2x2x1
jax: 0.10.0
libtpu: 0.0.40
codegen_flags: <defaults>
</compile_context>

<pallas_src>
import math
from functools import lru_cache

import jax
import jax.numpy as jnp
from jax.experimental import pallas as pl
from jax.experimental.pallas import tpu as pltpu


def make_positional_encoding(d_model: int, max_len: int) -> jnp.ndarray:
    """Deterministic buffer construction, identical to the PyTorch __init__."""
    assert d_model % 2 == 0, "d_model must be even (same constraint as the PyTorch module)"
    position = jnp.arange(0, max_len, dtype=jnp.float32)[:, None]            # (max_len, 1)
    div_term = jnp.exp(-jnp.arange(0, d_model, 2, dtype=jnp.float32)
                       * (math.log(10000.0) / d_model))                      # (d_model//2,)
    enc = jnp.zeros((max_len, d_model), dtype=jnp.float32)
    enc = enc.at[:, 0::2].set(jnp.sin(position * div_term))
    enc = enc.at[:, 1::2].set(jnp.cos(position * div_term))
    return enc                                                               # (max_len, d_model)


def _sublane(itemsize: int) -> int:
    # Min second-to-last tile dim: 8 (4-byte), 16 (2-byte), 32 (1-byte dtypes).
    return max(8, 32 // itemsize)


@lru_cache(maxsize=None)
def _gen_params():
    """Returns (block_target_bytes, vmem_limit_bytes), tuned per TPU generation."""
    vmem_cap = 128 * 1024 * 1024
    try:
        info = pltpu.get_tpu_info()
        cap = getattr(info, "vmem_capacity_bytes", None)
        if cap:
            vmem_cap = int(cap)
    except Exception:
        pass
    if vmem_cap <= 64 * 1024 * 1024:
        # v7x-class: ~3.2 TB/s HBM but only 64 MiB VMEM -> bigger blocks, tighter limit.
        block_target = 4 * 1024 * 1024
    else:
        # v5e / v6e: 2 MiB blocks already sit >90% of the HBM roofline.
        block_target = 2 * 1024 * 1024
    vmem_limit = min(48 * 1024 * 1024, vmem_cap // 2)
    return block_target, vmem_limit


def _even_tile(total: int, cap: int, align: int) -> int:
    """Largest tile <= cap that is a multiple of `align` and (preferably) divides
    `total` evenly; falls back to an align-rounded cap (masked tail tile)."""
    cap = max(align, min(cap, total))
    if total <= cap:
        return total                              # full dim -> always a legal block shape
    fallback = max(align, (cap // align) * align)
    if total % align == 0:
        n0 = -(-total // cap)                     # minimum number of tiles
        for n in range(n0, total // align + 1):
            if total % n == 0 and (total // n) % align == 0:
                return total // n
    return fallback


def _choose_lane_width(flat: int) -> int:
    """Pick a multiple of 128 dividing `flat`, as wide as reasonably possible."""
    m = flat // 128
    for k in (64, 32, 16, 8, 4, 2, 1):
        if m % k == 0:
            return 128 * k
    return 128


# ---------------------------------------------------------------------------
# Kernels
# ---------------------------------------------------------------------------
def _pe_add_kernel_3d(x_ref, enc_ref, o_ref):
    # x_ref/o_ref: (bt, ts, D); enc_ref: (ts, D) -> broadcast over the leading
    # batch dim (pure vreg reuse, no cross-lane traffic).
    o_ref[...] = x_ref[...] + enc_ref[...]


def _pe_add_kernel_flat(x_ref, enc_ref, o_ref):
    # x_ref/o_ref: (bt, t); enc_ref: (1, t) -> cheap sublane broadcast.
    o_ref[...] = x_ref[...] + enc_ref[...]


# ---------------------------------------------------------------------------
# Wrappers
# ---------------------------------------------------------------------------
def _forward_tiled_3d(x: jnp.ndarray, enc: jnp.ndarray) -> jnp.ndarray:
    """Main path: x (B, S, D) with D % 128 == 0, enc (S, D)."""
    B, S, D = x.shape
    itemsize = jnp.dtype(x.dtype).itemsize
    sub = _sublane(itemsize)
    target, vmem_limit = _gen_params()

    row_bytes = D * itemsize
    ts = _even_tile(S, max(sub, target // row_bytes), sub)

    # Batch packing: when one seq tile is small, pack several batch rows per block
    # so the ~0.35 us per-grid-step overhead amortizes over a ~target-sized block.
    block_bytes = ts * row_bytes
    bt = 1
    if B > 1 and block_bytes < target:
        bt = max(1, min(B, target // block_bytes))
        while bt > 1 and B % bt != 0:             # avoid a partially-masked batch tail
            bt -= 1

    grid = (pl.cdiv(S, ts), pl.cdiv(B, bt))       # batch innermost -> enc tile resident

    return pl.pallas_call(
        _pe_add_kernel_3d,
        out_shape=jax.ShapeDtypeStruct((B, S, D), x.dtype),
        grid_spec=pltpu.PrefetchScalarGridSpec(
            num_scalar_prefetch=0,
            grid=grid,
            in_specs=[
                pl.BlockSpec((bt, ts, D), lambda s, b: (b, s, 0)),
                pl.BlockSpec((ts, D), lambda s, b: (s, 0)),
            ],
            out_specs=pl.BlockSpec((bt, ts, D), lambda s, b: (b, s, 0)),
        ),
        compiler_params=pltpu.CompilerParams(
            dimension_semantics=("parallel", "parallel"),
            vmem_limit_bytes=vmem_limit,
        ),
    )(x, enc)


def _forward_flat(x: jnp.ndarray, enc: jnp.ndarray) -> jnp.ndarray:
    """Fallback for shapes where S*D is not a multiple of 128 (masked tail stores)."""
    B, S, D = x.shape
    flat = S * D
    itemsize = jnp.dtype(x.dtype).itemsize
    sub = _sublane(itemsize)
    target, vmem_limit = _gen_params()

    x_flat = x.reshape(B, flat)
    enc_flat = enc.reshape(1, flat)

    bt = B if B <= sub else sub
    # Per-block byte budget accounts for the batch tile (perf-review fix #1).
    t_cap = max(128, target // (bt * itemsize))
    t = flat if flat <= t_cap else max(128, (t_cap // 128) * 128)

    grid = (pl.cdiv(flat, t), pl.cdiv(B, bt))     # batch innermost -> enc tile resident

    out_flat = pl.pallas_call(
        _pe_add_kernel_flat,
        out_shape=jax.ShapeDtypeStruct((B, flat), x.dtype),
        grid_spec=pltpu.PrefetchScalarGridSpec(
            num_scalar_prefetch=0,
            grid=grid,
            in_specs=[
                pl.BlockSpec((bt, t), lambda s, b: (b, s)),
                pl.BlockSpec((1, t), lambda s, b: (0, s)),
            ],
            out_specs=pl.BlockSpec((bt, t), lambda s, b: (b, s)),
        ),
        compiler_params=pltpu.CompilerParams(
            dimension_semantics=("parallel", "parallel"),
            vmem_limit_bytes=vmem_limit,
        ),
    )(x_flat, enc_flat)
    return out_flat.reshape(B, S, D)


def positional_encoding_forward(x: jnp.ndarray, encoding: jnp.ndarray) -> jnp.ndarray:
    """x: (B, S, D); encoding: (max_len, D). Returns x + encoding[:S] broadcast over batch."""
    B, S, D = x.shape
    max_len, d_enc = encoding.shape
    if d_enc != D:
        raise ValueError(f"encoding d_model {d_enc} != input d_model {D}")
    if S > max_len:
        raise ValueError(f"sequence length {S} exceeds max_len {max_len}")

    # Match PyTorch promotion: the buffer is f32, so bf16/f16 inputs promote the output.
    out_dtype = jnp.promote_types(x.dtype, encoding.dtype)
    x = x.astype(out_dtype)
    enc = encoding[:S].astype(out_dtype)          # slice/cast only the rows actually used

    if D % 128 == 0:
        return _forward_tiled_3d(x, enc)

    flat = S * D
    if flat % 128 == 0:
        # Refactor (S, D) into a lane-dense pseudo (S', D') with D' % 128 == 0 so
        # output stores stay unmasked full-width vst; pure metadata reshapes in the wrapper.
        d2 = _choose_lane_width(flat)
        s2 = flat // d2
        out = _forward_tiled_3d(x.reshape(B, s2, d2), enc.reshape(s2, d2))
        return out.reshape(B, S, D)

    # TODO(synk): for tiny odd shapes a fused XLA `x + enc[None]` would beat a
    # standalone pallas_call; we still dispatch to Pallas per the exercise.
    return _forward_flat(x, enc)


if __name__ == "__main__":
    key = jax.random.PRNGKey(0)
    k1, k2, k3, k4 = jax.random.split(key, 4)

    # Case 1: small d_model (not a multiple of 128) -> lane-dense pseudo-reshape path.
    d_model, max_len, B, S = 32, 16, 2, 8
    encoding = make_positional_encoding(d_model, max_len)
    x = jax.random.normal(k1, (B, S, d_model), dtype=jnp.float32)
    out = jax.block_until_ready(positional_encoding_forward(x, encoding))
    ref = x + encoding[None, :S, :]
    assert out.shape == (B, S, d_model)
    assert jnp.allclose(out, ref, atol=1e-6), "mismatch vs reference (reshape path)"

    # Case 2: lane-aligned d_model (multiple of 128) -> tiled 3-D path with batch packing.
    d_model2, max_len2, B2, S2 = 128, 32, 2, 16
    encoding2 = make_positional_encoding(d_model2, max_len2)
    x2 = jax.random.normal(k2, (B2, S2, d_model2), dtype=jnp.float32)
    out2 = jax.block_until_ready(positional_encoding_forward(x2, encoding2))
    ref2 = x2 + encoding2[None, :S2, :]
    assert out2.shape == (B2, S2, d_model2)
    assert jnp.allclose(out2, ref2, atol=1e-6), "mismatch vs reference (3D path)"

    # Case 3: odd shape where S*D is not a multiple of 128 -> flat fallback path.
    d_model3, max_len3, B3, S3 = 20, 16, 2, 7
    encoding3 = make_positional_encoding(d_model3, max_len3)
    x3 = jax.random.normal(k3, (B3, S3, d_model3), dtype=jnp.float32)
    out3 = jax.block_until_ready(positional_encoding_forward(x3, encoding3))
    ref3 = x3 + encoding3[None, :S3, :]
    assert out3.shape == (B3, S3, d_model3)
    assert jnp.allclose(out3, ref3, atol=1e-6), "mismatch vs reference (flat path)"

    # Case 4: bf16 input promotes to f32 output (matches PyTorch buffer promotion).
    x4 = jax.random.normal(k4, (B2, S2, d_model2), dtype=jnp.bfloat16)
    out4 = jax.block_until_ready(positional_encoding_forward(x4, encoding2))
    ref4 = x4.astype(jnp.float32) + encoding2[None, :S2, :]
    assert out4.dtype == jnp.float32
    assert jnp.allclose(out4, ref4, atol=1e-6), "mismatch vs reference (bf16 promotion)"

    print("KERNEL_OK")
</pallas_src>

<mosaic_0001>
module attributes {stable_mosaic.version = 11 : i64} {
  func.func @_pe_add_kernel_3d(%arg0: i32, %arg1: i32, %arg2: memref<2x1x256xf32, #tpu.memory_space<vmem>>, %arg3: memref<1x256xf32, #tpu.memory_space<vmem>>, %arg4: memref<2x1x256xf32, #tpu.memory_space<vmem>>) attributes {dimension_semantics = [#tpu.dimension_semantics<parallel>, #tpu.dimension_semantics<parallel>], iteration_bounds = array<i64: 1, 1>, scalar_prefetch = 0 : i64, scratch_operands = 0 : i64, tpu.core_type = #tpu.core_type<tc>, window_params = [{transform_indices = @transform_0, window_bounds = array<i64: 2, 1, 256>}, {transform_indices = @transform_1, window_bounds = array<i64: 1, 256>}, {transform_indices = @transform_2, window_bounds = array<i64: 2, 1, 256>}]} {
    %c0 = arith.constant 0 : index
    %c0_0 = arith.constant 0 : index
    %c0_1 = arith.constant 0 : index
    %0 = vector.load %arg2[%c0, %c0_0, %c0_1] : memref<2x1x256xf32, #tpu.memory_space<vmem>>, vector<2x1x256xf32>
    %c0_2 = arith.constant 0 : index
    %c0_3 = arith.constant 0 : index
    %1 = vector.load %arg3[%c0_2, %c0_3] : memref<1x256xf32, #tpu.memory_space<vmem>>, vector<1x256xf32>
    %2 = vector.shape_cast %1 : vector<1x256xf32> to vector<1x1x256xf32>
    %3 = vector.broadcast %2 : vector<1x1x256xf32> to vector<2x1x256xf32>
    %4 = arith.addf %0, %3 : vector<2x1x256xf32>
    %c0_4 = arith.constant 0 : index
    %c0_5 = arith.constant 0 : index
    %c0_6 = arith.constant 0 : index
    %5 = vector.load %arg4[%c0_4, %c0_5, %c0_6] : memref<2x1x256xf32, #tpu.memory_space<vmem>>, vector<2x1x256xf32>
    tpu.vector_store %arg4[%c0_4, %c0_5, %c0_6], %4 {strides = array<i32>} : memref<2x1x256xf32, #tpu.memory_space<vmem>>, vector<2x1x256xf32>,
    return
  }
  func.func @transform_0(%arg0: i32, %arg1: i32) -> (i32, i32, i32) {
    %c0_i32 = arith.constant 0 : i32
    %c0_i32_0 = arith.constant 0 : i32
    return %arg1, %arg0, %c0_i32 : i32, i32, i32
  }
  func.func @transform_1(%arg0: i32, %arg1: i32) -> (i32, i32) {
    %c0_i32 = arith.constant 0 : i32
    %c0_i32_0 = arith.constant 0 : i32
    return %arg0, %c0_i32 : i32, i32
  }
  func.func @transform_2(%arg0: i32, %arg1: i32) -> (i32, i32, i32) {
    %c0_i32 = arith.constant 0 : i32
    %c0_i32_0 = arith.constant 0 : i32
    return %arg1, %arg0, %c0_i32 : i32, i32, i32
  }
}

</mosaic_0001>

<llo_original>
// kernel: tpu_custom_call.1
$region0: #{tpu_custom_call.1}
  #allocation0 [shape = 'u32[]', space=smem, size = 0x4, offset = 0x4, fixed_abs, tag = 'smem constant byte address 0x4 - core index']
  #allocation1 [shape = 'u32[144,128]{1,0:T(1,128)}', space=vmem, size = 0x12000, scoped, tag = 'internal scratch']
  %s0 = inlined_call_operand.hbm [shape: f32[2,1,256], index: 0, kind: input, shape index: {}]
  %s1 = inlined_call_operand.vmem [shape: f32[1,256], index: 1, kind: input, shape index: {}]
  %s2 = inlined_call_operand.hbm [shape: f32[2,1,256], index: 2, kind: output, shape index: {}]
  %s3 = sld [smem:[#allocation0]]
  $region22: #{tpu_custom_call.1} parent=0
    _
  %s5 = ssub.s32 1, %s3
  %s6 = scalar_select 0, %s5, %s3
  $region1: #{tpu_custom_call.1} parent=0
    #allocation2 [shape = 'u8[2048]{0}', space=vmem, size = 0x800, scoped, tag = 'input window, operand 0, single buffered']
    #allocation3 [shape = 's32[1]{0}', space=sflag, size = 0x4, scoped, tag = 'scoped memory for tpu_custom_call.1']
    #allocation4 [shape = 's32[1]{0}', space=sflag, size = 0x4, scoped, tag = 'scoped memory for tpu_custom_call.1']
    #allocation5 [shape = 'u8[2048]{0}', space=vmem, size = 0x800, scoped, tag = 'output window, operand 0, single buffered']
    %7 = vsyncpa [#allocation3], 0
    %8 = vsyncpa [#allocation4], 0
    // Predicated region
    $region2: #{tpu_custom_call.1} parent=1 // pred_check
      _
    $region3: #{tpu_custom_call.1} parent=1 // pred_check_branch
      %10 = sbr.rel (0) target = $region5
    $region4: #{tpu_custom_call.1} parent=1 // pred_region
      %s12 = ssub.s32 64, 64
      %13 = vsyncadd [#allocation3], %s12
      %s14 = sshll.u32 [#allocation2], 4
      %s15 = int_to_ptr.vmem [resolvable:$true] %s14
      %20 = dma.hbm_to_vmem [thread:$0]  %s0, 64, %s15, [#allocation3], 32, 32, 2
    $region5: #{tpu_custom_call.1} parent=1 // pred_fallthru
      _
    // Predicated region
    $region6: #{tpu_custom_call.1} parent=1 // pred_check
      _
    $region7: #{tpu_custom_call.1} parent=1 // pred_check_branch
      %22 = sbr.rel (0) target = $region9
    $region8: #{tpu_custom_call.1} parent=1 // pred_region
      _
    $region9: #{tpu_custom_call.1} parent=1 // pred_fallthru
      _
    // Predicated region
    $region10: #{tpu_custom_call.1} parent=1 // pred_check
      _
    $region11: #{tpu_custom_call.1} parent=1 // pred_check_branch
      %24 = sbr.rel (0) target = $region13
    $region12: #{tpu_custom_call.1} parent=1 // pred_region
      %25 = dma.done [#allocation3], 64
    $region13: #{tpu_custom_call.1} parent=1 // pred_fallthru
      _
    %v26 = vld [vmem:[#allocation2] sm:$0x3]
    %v27 = vld [vmem:[#allocation2 + $0x2] sm:$0x3]
    %v28 = vld [vmem:[%s1] sm:$0x3]
    %v29 = vadd.f32 %v26, %v28
    %v30 = vadd.f32 %v27, %v28
    %v31 = vlaneseq
    %vm32 = vcmp.ge.s32.totalorder %v31, 0
    %vm33 = vcmp.lt.s32.totalorder %v31, 256
    %vm34 = vmand %vm32, %vm33
    %35 = vst.msk [vmem:[#allocation5] sm:$0x3] %vm34, %v29
    %36 = vst.msk [vmem:[#allocation5 + $0x2] sm:$0x3] %vm34, %v30
    // Predicated region
    $region14: #{tpu_custom_call.1} parent=1 // pred_check
      _
    $region15: #{tpu_custom_call.1} parent=1 // pred_check_branch
      %38 = sbr.rel (0) target = $region17
    $region16: #{tpu_custom_call.1} parent=1 // pred_region
      %s40 = ssub.s32 64, 64
      %41 = vsyncadd [#allocation4], %s40
      %s42 = sshll.u32 [#allocation5], 4
      %s43 = int_to_ptr.vmem [resolvable:$true] %s42
      %48 = dma.vmem_to_hbm [thread:$0]  %s43, 64, %s2, [#allocation4], 32, 32, 2
    $region17: #{tpu_custom_call.1} parent=1 // pred_fallthru
      _
    // Predicated region
    $region18: #{tpu_custom_call.1} parent=1 // pred_check
      _
    $region19: #{tpu_custom_call.1} parent=1 // pred_check_branch
      %50 = sbr.rel (0) target = $region21
    $region20: #{tpu_custom_call.1} parent=1 // pred_region
      %51 = dma.done [#allocation4], 64
    $region21: #{tpu_custom_call.1} parent=1 // pred_fallthru
      _
    %52 = vsyncpa [#allocation3], 1
    %53 = vsyncpa [#allocation4], 1

</llo_original>
